<compile_context>
chip_gen: v6e
topology: v6e:2x2x1
jax: 0.10.0
libtpu: 0.0.40
codegen_flags: <defaults>
</compile_context>

<pallas_src>
import functools

import jax
import jax.numpy as jnp
import numpy as np
from jax import lax
from jax.experimental import pallas as pl
from jax.experimental.pallas import tpu as pltpu

EPS = 1e-5  # nn.LayerNorm default eps


# --------------------------------------------------------------------------
# In-kernel helpers
# --------------------------------------------------------------------------
def _gelu(x, approx):
    if approx:
        return jax.nn.gelu(x, approximate=True)        # tanh -> EUP slot
    # nn.GELU() default (approximate='none'): 0.5*x*(1+erf(x/sqrt(2)))
    return 0.5 * x * (1.0 + lax.erf(x * jnp.float32(0.7071067811865476)))


def _segment_mean(a, sel, inv_n):
    """Mean over (all T rows x one C-lane segment), broadcast back to lanes.

    a: (T, L) f32; sel: (L, L) block-diagonal ones (one CxC block per batch
    element folded into the lanes).  a @ sel gives per-row segment sums; the
    sublane reduce finishes the (T, C)-slab sum.
    """
    seg = jnp.dot(a, sel, preferred_element_type=jnp.float32)    # (T, L)
    return jnp.sum(seg, axis=0, keepdims=True) * inv_n           # (1, L)


def _layernorm_lane(x, w, b, sel, inv_n):
    """Per-batch-element LayerNorm over its (T, C) slab, lane-dense, two-pass."""
    mu = _segment_mean(x, sel, inv_n)
    d = x - mu
    var = _segment_mean(d * d, sel, inv_n)
    return d * lax.rsqrt(var + EPS) * w + b


def _mixer_kernel(x_ref, ln1_w_ref, ln1_b_ref, wt_ref, bt_ref,
                  ln2_w_ref, ln2_b_ref, sel_ref, k1_ref, b1_ref, k2_ref, b2_ref,
                  out_ref, *, inv_n, matmul_dtype, gelu_approx):
    f32 = jnp.float32

    def cast(a):  # activation-side cast only; weights are pre-cast in the wrapper
        return a if matmul_dtype is None else a.astype(matmul_dtype)

    x = x_ref[0].astype(f32)                                   # (T, L) lane-dense
    sel = sel_ref[...]

    # ---- LN_1 (per batch element over its (T, C) slab) ----
    xn = _layernorm_lane(x, ln1_w_ref[...], ln1_b_ref[...], sel, inv_n)

    # ---- TriU time mixer: one (T, T) @ (T, L) MXU matmul + bias + residual ----
    tm = jnp.dot(wt_ref[...], cast(xn), preferred_element_type=f32)
    z = tm + bt_ref[...] + x

    # ---- LN_2 ----
    zn = _layernorm_lane(z, ln2_w_ref[...], ln2_b_ref[...], sel, inv_n)

    # ---- channel MixerBlock: Linear(C,C) -> GELU -> Linear(C,C), block-diag ----
    h = _gelu(jnp.dot(cast(zn), k1_ref[...], preferred_element_type=f32)
              + b1_ref[...], gelu_approx)
    y = jnp.dot(cast(h), k2_ref[...], preferred_element_type=f32) + b2_ref[...]

    out_ref[0] = (zn + y).astype(out_ref.dtype)


# --------------------------------------------------------------------------
# Wrapper
# --------------------------------------------------------------------------
def _choose_batch_group(B, C, lane_width=128):
    """Largest divisor of B whose lane footprint Bg*C fits the 128-lane vreg."""
    target = max(1, lane_width // C) if C <= lane_width else 1
    for d in range(min(B, target), 0, -1):
        if B % d == 0:
            return d
    return 1


def prepare_operands(params, *, batch_group, matmul_dtype=None):
    """Build lane-dense weight operands once (reuse across calls if params are static)."""
    p = params
    T, C = p["ln1_w"].shape
    Bg = batch_group
    L = Bg * C
    f32 = jnp.float32

    def lane_tile(w):                                   # (T, C) -> (T, Bg*C)
        return jnp.tile(w, (1, Bg))

    wt = p["wt"]
    k1 = jnp.kron(jnp.eye(Bg, dtype=f32), p["w1"])      # (L, L) block-diag channel mix
    k2 = jnp.kron(jnp.eye(Bg, dtype=f32), p["w2"])
    if matmul_dtype is not None:                        # pre-cast MXU weights once
        wt = wt.astype(matmul_dtype)
        k1 = k1.astype(matmul_dtype)
        k2 = k2.astype(matmul_dtype)

    sel = jnp.kron(jnp.eye(Bg, dtype=f32), jnp.ones((C, C), f32))  # LN segment selector

    return dict(
        ln1_w=lane_tile(p["ln1_w"]), ln1_b=lane_tile(p["ln1_b"]),
        wt=wt, bt=jnp.broadcast_to(p["bt"], (T, L)),
        ln2_w=lane_tile(p["ln2_w"]), ln2_b=lane_tile(p["ln2_b"]),
        sel=sel,
        k1=k1, b1=jnp.tile(p["b1"], (1, Bg)),
        k2=k2, b2=jnp.tile(p["b2"], (1, Bg)),
    )


@functools.partial(jax.jit,
                   static_argnames=("batch_group", "matmul_dtype", "gelu_approx"))
def _mixer2d_triu_lane(x, ops, *, batch_group, matmul_dtype, gelu_approx):
    B, T, C = x.shape
    Bg = batch_group
    assert B % Bg == 0
    G = B // Bg
    L = Bg * C

    # (B, T, C) -> (G, T, Bg*C): fold Bg batch elements into the lane dimension.
    x_lane = x.reshape(G, Bg, T, C).transpose(0, 2, 1, 3).reshape(G, T, L)

    def const_spec(shape):
        # Grid-invariant weights: DMA'd once, stay resident across grid steps.
        # (pl.Buffered(1) could single-buffer them for large-T configs.)
        return pl.BlockSpec(shape, lambda g: (0,) * len(shape))

    grid_spec = pltpu.PrefetchScalarGridSpec(
        num_scalar_prefetch=0,
        grid=(G,),
        in_specs=[
            pl.BlockSpec((1, T, L), lambda g: (g, 0, 0)),   # x (lane-dense)
            const_spec((T, L)),    # ln1_w
            const_spec((T, L)),    # ln1_b
            const_spec((T, T)),    # wt  (lower-triangular time mix)
            const_spec((T, L)),    # bt  (pre-broadcast)
            const_spec((T, L)),    # ln2_w
            const_spec((T, L)),    # ln2_b
            const_spec((L, L)),    # sel (block-diag ones for LN segment reduce)
            const_spec((L, L)),    # kron(I_Bg, w1)
            const_spec((1, L)),    # b1
            const_spec((L, L)),    # kron(I_Bg, w2)
            const_spec((1, L)),    # b2
        ],
        out_specs=pl.BlockSpec((1, T, L), lambda g: (g, 0, 0)),
    )

    kernel = functools.partial(_mixer_kernel, inv_n=1.0 / (T * C),
                               matmul_dtype=matmul_dtype, gelu_approx=gelu_approx)
    out_lane = pl.pallas_call(
        kernel,
        out_shape=jax.ShapeDtypeStruct((G, T, L), x.dtype),
        grid_spec=grid_spec,
        compiler_params=pltpu.CompilerParams(
            dimension_semantics=("parallel",),
            vmem_limit_bytes=32 * 1024 * 1024,
        ),
    )(x_lane, ops["ln1_w"], ops["ln1_b"], ops["wt"], ops["bt"],
      ops["ln2_w"], ops["ln2_b"], ops["sel"], ops["k1"], ops["b1"],
      ops["k2"], ops["b2"])

    # Undo the lane-dense layout.
    return out_lane.reshape(G, T, Bg, C).transpose(0, 2, 1, 3).reshape(B, T, C)


def mixer2d_triu(x, params, *, batch_group=None, matmul_dtype=None,
                 gelu_approx=False):
    B, T, C = x.shape
    Bg = _choose_batch_group(B, C) if batch_group is None else batch_group
    ops = prepare_operands(params, batch_group=Bg, matmul_dtype=matmul_dtype)
    return _mixer2d_triu_lane(x, ops, batch_group=Bg, matmul_dtype=matmul_dtype,
                              gelu_approx=gelu_approx)


# --------------------------------------------------------------------------
# Pure-JAX reference (mirrors the PyTorch forward) + parameter init
# --------------------------------------------------------------------------
def mixer2d_triu_reference(x, p):
    mu = jnp.mean(x, axis=(1, 2), keepdims=True)
    var = jnp.mean((x - mu) ** 2, axis=(1, 2), keepdims=True)
    xn = (x - mu) / jnp.sqrt(var + EPS) * p["ln1_w"] + p["ln1_b"]

    tm = jnp.einsum("oi,bic->boc", p["wt"], xn) + p["bt"]

    z = tm + x
    mu2 = jnp.mean(z, axis=(1, 2), keepdims=True)
    var2 = jnp.mean((z - mu2) ** 2, axis=(1, 2), keepdims=True)
    zn = (z - mu2) / jnp.sqrt(var2 + EPS) * p["ln2_w"] + p["ln2_b"]

    h = jax.nn.gelu(zn @ p["w1"] + p["b1"], approximate=False)
    y = h @ p["w2"] + p["b2"]
    return zn + y


def init_params(key, T, C):
    ks = jax.random.split(key, 12)
    f32 = jnp.float32

    ln1_w = 1.0 + 0.1 * jax.random.normal(ks[0], (T, C), f32)
    ln1_b = 0.1 * jax.random.normal(ks[1], (T, C), f32)
    ln2_w = 1.0 + 0.1 * jax.random.normal(ks[2], (T, C), f32)
    ln2_b = 0.1 * jax.random.normal(ks[3], (T, C), f32)

    # TriU: Linear(i+1, 1) for i in range(T) -> lower-triangular (T_out, T_in)
    bound_t = 1.0 / np.sqrt(T)
    wt_raw = jax.random.uniform(ks[4], (T, T), f32, -bound_t, bound_t)
    mask = (jnp.arange(T)[None, :] <= jnp.arange(T)[:, None]).astype(f32)
    wt = wt_raw * mask
    bt = jax.random.uniform(ks[5], (T, 1), f32, -bound_t, bound_t)

    # MixerBlock: Linear(C,C) -> GELU -> Linear(C,C). Stored transposed (in, out).
    bound_c = 1.0 / np.sqrt(C)
    w1 = jax.random.uniform(ks[6], (C, C), f32, -bound_c, bound_c)
    b1 = jax.random.uniform(ks[7], (1, C), f32, -bound_c, bound_c)
    w2 = jax.random.uniform(ks[8], (C, C), f32, -bound_c, bound_c)
    b2 = jax.random.uniform(ks[9], (1, C), f32, -bound_c, bound_c)

    return dict(ln1_w=ln1_w, ln1_b=ln1_b, wt=wt, bt=bt,
                ln2_w=ln2_w, ln2_b=ln2_b, w1=w1, b1=b1, w2=w2, b2=b2)


if __name__ == "__main__":
    B, T, C = 8, 16, 16  # batch, time_steps, channels
    key = jax.random.PRNGKey(0)
    k_x, k_p = jax.random.split(key)

    x = jax.random.normal(k_x, (B, T, C), jnp.float32)
    params = init_params(k_p, T, C)

    out = jax.block_until_ready(mixer2d_triu(x, params))
    ref = jax.block_until_ready(mixer2d_triu_reference(x, params))

    assert out.shape == (B, T, C)
    np.testing.assert_allclose(np.asarray(out), np.asarray(ref),
                               rtol=1e-3, atol=1e-3)

    print("KERNEL_OK")
</pallas_src>

<mosaic_0001>
module attributes {stable_mosaic.version = 11 : i64} {
  func.func @_mixer_kernel(%arg0: i32, %arg1: memref<1x16x128xf32, #tpu.memory_space<vmem>>, %arg2: memref<16x128xf32, #tpu.memory_space<vmem>>, %arg3: memref<16x128xf32, #tpu.memory_space<vmem>>, %arg4: memref<16x16xf32, #tpu.memory_space<vmem>>, %arg5: memref<16x128xf32, #tpu.memory_space<vmem>>, %arg6: memref<16x128xf32, #tpu.memory_space<vmem>>, %arg7: memref<16x128xf32, #tpu.memory_space<vmem>>, %arg8: memref<128x128xf32, #tpu.memory_space<vmem>>, %arg9: memref<128x128xf32, #tpu.memory_space<vmem>>, %arg10: memref<1x128xf32, #tpu.memory_space<vmem>>, %arg11: memref<128x128xf32, #tpu.memory_space<vmem>>, %arg12: memref<1x128xf32, #tpu.memory_space<vmem>>, %arg13: memref<1x16x128xf32, #tpu.memory_space<vmem>>) attributes {dimension_semantics = [#tpu.dimension_semantics<parallel>], iteration_bounds = array<i64: 1>, scalar_prefetch = 0 : i64, scratch_operands = 0 : i64, tpu.core_type = #tpu.core_type<tc>, window_params = [{transform_indices = @transform_0, window_bounds = array<i64: 1, 16, 128>}, {pipeline_mode = #tpu.pipeline_mode<synchronous>, transform_indices = @transform_1, window_bounds = array<i64: 16, 128>}, {pipeline_mode = #tpu.pipeline_mode<synchronous>, transform_indices = @transform_2, window_bounds = array<i64: 16, 128>}, {pipeline_mode = #tpu.pipeline_mode<synchronous>, transform_indices = @transform_3, window_bounds = array<i64: 16, 16>}, {pipeline_mode = #tpu.pipeline_mode<synchronous>, transform_indices = @transform_4, window_bounds = array<i64: 16, 128>}, {pipeline_mode = #tpu.pipeline_mode<synchronous>, transform_indices = @transform_5, window_bounds = array<i64: 16, 128>}, {pipeline_mode = #tpu.pipeline_mode<synchronous>, transform_indices = @transform_6, window_bounds = array<i64: 16, 128>}, {pipeline_mode = #tpu.pipeline_mode<synchronous>, transform_indices = @transform_7, window_bounds = array<i64: 128, 128>}, {pipeline_mode = #tpu.pipeline_mode<synchronous>, transform_indices = @transform_8, window_bounds = array<i64: 128, 128>}, {pipeline_mode = #tpu.pipeline_mode<synchronous>, transform_indices = @transform_9, window_bounds = array<i64: 1, 128>}, {pipeline_mode = #tpu.pipeline_mode<synchronous>, transform_indices = @transform_10, window_bounds = array<i64: 128, 128>}, {pipeline_mode = #tpu.pipeline_mode<synchronous>, transform_indices = @transform_11, window_bounds = array<i64: 1, 128>}, {transform_indices = @transform_12, window_bounds = array<i64: 1, 16, 128>}]} {
    %c0 = arith.constant 0 : index
    %c0_0 = arith.constant 0 : index
    %c0_1 = arith.constant 0 : index
    %0 = vector.load %arg1[%c0, %c0_0, %c0_1] : memref<1x16x128xf32, #tpu.memory_space<vmem>>, vector<1x16x128xf32>
    %1 = vector.shape_cast %0 : vector<1x16x128xf32> to vector<16x128xf32>
    %c0_2 = arith.constant 0 : index
    %c0_3 = arith.constant 0 : index
    %2 = vector.load %arg8[%c0_2, %c0_3] : memref<128x128xf32, #tpu.memory_space<vmem>>, vector<128x128xf32>
    %c0_4 = arith.constant 0 : index
    %c0_5 = arith.constant 0 : index
    %3 = vector.load %arg2[%c0_4, %c0_5] : memref<16x128xf32, #tpu.memory_space<vmem>>, vector<16x128xf32>
    %c0_6 = arith.constant 0 : index
    %c0_7 = arith.constant 0 : index
    %4 = vector.load %arg3[%c0_6, %c0_7] : memref<16x128xf32, #tpu.memory_space<vmem>>, vector<16x128xf32>
    %cst = arith.constant dense<0.000000e+00> : vector<16x128xf32>
    %5 = tpu.matmul %1, %2, %cst {dimension_numbers = #tpu.dot_dimension_numbers<[1], [0], [0], [1], [0, 0, 1, 1], [], []>} : vector<16x128xf32>, vector<128x128xf32>, vector<16x128xf32> -> vector<16x128xf32>
    %cst_8 = arith.constant dense<0.000000e+00> : vector<128xf32>
    %6 = vector.multi_reduction <add>, %5, %cst_8 [0] : vector<16x128xf32> to vector<128xf32>
    %7 = vector.shape_cast %6 : vector<128xf32> to vector<1x128xf32>
    %cst_9 = arith.constant 3.906250e-03 : f32
    %8 = vector.broadcast %cst_9 : f32 to vector<1x128xf32>
    %9 = arith.mulf %7, %8 : vector<1x128xf32>
    %10 = vector.broadcast %9 : vector<1x128xf32> to vector<16x128xf32>
    %11 = arith.subf %1, %10 : vector<16x128xf32>
    %12 = arith.mulf %11, %11 : vector<16x128xf32>
    %cst_10 = arith.constant dense<0.000000e+00> : vector<16x128xf32>
    %13 = tpu.matmul %12, %2, %cst_10 {dimension_numbers = #tpu.dot_dimension_numbers<[1], [0], [0], [1], [0, 0, 1, 1], [], []>} : vector<16x128xf32>, vector<128x128xf32>, vector<16x128xf32> -> vector<16x128xf32>
    %cst_11 = arith.constant dense<0.000000e+00> : vector<128xf32>
    %14 = vector.multi_reduction <add>, %13, %cst_11 [0] : vector<16x128xf32> to vector<128xf32>
    %15 = vector.shape_cast %14 : vector<128xf32> to vector<1x128xf32>
    %cst_12 = arith.constant 3.906250e-03 : f32
    %16 = vector.broadcast %cst_12 : f32 to vector<1x128xf32>
    %17 = arith.mulf %15, %16 : vector<1x128xf32>
    %cst_13 = arith.constant 9.99999974E-6 : f32
    %18 = vector.broadcast %cst_13 : f32 to vector<1x128xf32>
    %19 = arith.addf %17, %18 : vector<1x128xf32>
    %20 = math.rsqrt %19 : vector<1x128xf32>
    %21 = vector.broadcast %20 : vector<1x128xf32> to vector<16x128xf32>
    %22 = arith.mulf %11, %21 : vector<16x128xf32>
    %23 = arith.mulf %22, %3 : vector<16x128xf32>
    %24 = arith.addf %23, %4 : vector<16x128xf32>
    %c0_14 = arith.constant 0 : index
    %c0_15 = arith.constant 0 : index
    %25 = vector.load %arg4[%c0_14, %c0_15] : memref<16x16xf32, #tpu.memory_space<vmem>>, vector<16x16xf32>
    %cst_16 = arith.constant dense<0.000000e+00> : vector<16x128xf32>
    %26 = tpu.matmul %25, %24, %cst_16 {dimension_numbers = #tpu.dot_dimension_numbers<[1], [0], [0], [1], [0, 0, 1, 1], [], []>} : vector<16x16xf32>, vector<16x128xf32>, vector<16x128xf32> -> vector<16x128xf32>
    %c0_17 = arith.constant 0 : index
    %c0_18 = arith.constant 0 : index
    %27 = vector.load %arg5[%c0_17, %c0_18] : memref<16x128xf32, #tpu.memory_space<vmem>>, vector<16x128xf32>
    %28 = arith.addf %26, %27 : vector<16x128xf32>
    %29 = arith.addf %28, %1 : vector<16x128xf32>
    %c0_19 = arith.constant 0 : index
    %c0_20 = arith.constant 0 : index
    %30 = vector.load %arg6[%c0_19, %c0_20] : memref<16x128xf32, #tpu.memory_space<vmem>>, vector<16x128xf32>
    %c0_21 = arith.constant 0 : index
    %c0_22 = arith.constant 0 : index
    %31 = vector.load %arg7[%c0_21, %c0_22] : memref<16x128xf32, #tpu.memory_space<vmem>>, vector<16x128xf32>
    %cst_23 = arith.constant dense<0.000000e+00> : vector<16x128xf32>
    %32 = tpu.matmul %29, %2, %cst_23 {dimension_numbers = #tpu.dot_dimension_numbers<[1], [0], [0], [1], [0, 0, 1, 1], [], []>} : vector<16x128xf32>, vector<128x128xf32>, vector<16x128xf32> -> vector<16x128xf32>
    %cst_24 = arith.constant dense<0.000000e+00> : vector<128xf32>
    %33 = vector.multi_reduction <add>, %32, %cst_24 [0] : vector<16x128xf32> to vector<128xf32>
    %34 = vector.shape_cast %33 : vector<128xf32> to vector<1x128xf32>
    %cst_25 = arith.constant 3.906250e-03 : f32
    %35 = vector.broadcast %cst_25 : f32 to vector<1x128xf32>
    %36 = arith.mulf %34, %35 : vector<1x128xf32>
    %37 = vector.broadcast %36 : vector<1x128xf32> to vector<16x128xf32>
    %38 = arith.subf %29, %37 : vector<16x128xf32>
    %39 = arith.mulf %38, %38 : vector<16x128xf32>
    %cst_26 = arith.constant dense<0.000000e+00> : vector<16x128xf32>
    %40 = tpu.matmul %39, %2, %cst_26 {dimension_numbers = #tpu.dot_dimension_numbers<[1], [0], [0], [1], [0, 0, 1, 1], [], []>} : vector<16x128xf32>, vector<128x128xf32>, vector<16x128xf32> -> vector<16x128xf32>
    %cst_27 = arith.constant dense<0.000000e+00> : vector<128xf32>
    %41 = vector.multi_reduction <add>, %40, %cst_27 [0] : vector<16x128xf32> to vector<128xf32>
    %42 = vector.shape_cast %41 : vector<128xf32> to vector<1x128xf32>
    %cst_28 = arith.constant 3.906250e-03 : f32
    %43 = vector.broadcast %cst_28 : f32 to vector<1x128xf32>
    %44 = arith.mulf %42, %43 : vector<1x128xf32>
    %cst_29 = arith.constant 9.99999974E-6 : f32
    %45 = vector.broadcast %cst_29 : f32 to vector<1x128xf32>
    %46 = arith.addf %44, %45 : vector<1x128xf32>
    %47 = math.rsqrt %46 : vector<1x128xf32>
    %48 = vector.broadcast %47 : vector<1x128xf32> to vector<16x128xf32>
    %49 = arith.mulf %38, %48 : vector<16x128xf32>
    %50 = arith.mulf %49, %30 : vector<16x128xf32>
    %51 = arith.addf %50, %31 : vector<16x128xf32>
    %c0_30 = arith.constant 0 : index
    %c0_31 = arith.constant 0 : index
    %52 = vector.load %arg9[%c0_30, %c0_31] : memref<128x128xf32, #tpu.memory_space<vmem>>, vector<128x128xf32>
    %cst_32 = arith.constant dense<0.000000e+00> : vector<16x128xf32>
    %53 = tpu.matmul %51, %52, %cst_32 {dimension_numbers = #tpu.dot_dimension_numbers<[1], [0], [0], [1], [0, 0, 1, 1], [], []>} : vector<16x128xf32>, vector<128x128xf32>, vector<16x128xf32> -> vector<16x128xf32>
    %c0_33 = arith.constant 0 : index
    %c0_34 = arith.constant 0 : index
    %54 = vector.load %arg10[%c0_33, %c0_34] : memref<1x128xf32, #tpu.memory_space<vmem>>, vector<1x128xf32>
    %55 = vector.broadcast %54 : vector<1x128xf32> to vector<16x128xf32>
    %56 = arith.addf %53, %55 : vector<16x128xf32>
    %cst_35 = arith.constant 5.000000e-01 : f32
    %57 = vector.broadcast %cst_35 : f32 to vector<16x128xf32>
    %58 = arith.mulf %57, %56 : vector<16x128xf32>
    %cst_36 = arith.constant 0.707106769 : f32
    %59 = vector.broadcast %cst_36 : f32 to vector<16x128xf32>
    %60 = arith.mulf %56, %59 : vector<16x128xf32>
    %61 = math.erf %60 : vector<16x128xf32>
    %cst_37 = arith.constant 1.000000e+00 : f32
    %62 = vector.broadcast %cst_37 : f32 to vector<16x128xf32>
    %63 = arith.addf %62, %61 : vector<16x128xf32>
    %64 = arith.mulf %58, %63 : vector<16x128xf32>
    %c0_38 = arith.constant 0 : index
    %c0_39 = arith.constant 0 : index
    %65 = vector.load %arg11[%c0_38, %c0_39] : memref<128x128xf32, #tpu.memory_space<vmem>>, vector<128x128xf32>
    %cst_40 = arith.constant dense<0.000000e+00> : vector<16x128xf32>
    %66 = tpu.matmul %64, %65, %cst_40 {dimension_numbers = #tpu.dot_dimension_numbers<[1], [0], [0], [1], [0, 0, 1, 1], [], []>} : vector<16x128xf32>, vector<128x128xf32>, vector<16x128xf32> -> vector<16x128xf32>
    %c0_41 = arith.constant 0 : index
    %c0_42 = arith.constant 0 : index
    %67 = vector.load %arg12[%c0_41, %c0_42] : memref<1x128xf32, #tpu.memory_space<vmem>>, vector<1x128xf32>
    %68 = vector.broadcast %67 : vector<1x128xf32> to vector<16x128xf32>
    %69 = arith.addf %66, %68 : vector<16x128xf32>
    %70 = arith.addf %51, %69 : vector<16x128xf32>
    %c0_43 = arith.constant 0 : index
    %c0_44 = arith.constant 0 : index
    %c0_45 = arith.constant 0 : index
    %71 = vector.load %arg13[%c0_43, %c0_44, %c0_45] : memref<1x16x128xf32, #tpu.memory_space<vmem>>, vector<1x16x128xf32>
    %72 = vector.shape_cast %71 : vector<1x16x128xf32> to vector<16x128xf32>
    %73 = vector.shape_cast %70 : vector<16x128xf32> to vector<1x16x128xf32>
    tpu.vector_store %arg13[%c0_43, %c0_44, %c0_45], %73 {strides = array<i32>} : memref<1x16x128xf32, #tpu.memory_space<vmem>>, vector<1x16x128xf32>,
    return
  }
  func.func @transform_0(%arg0: i32) -> (i32, i32, i32) {
    %c0_i32 = arith.constant 0 : i32
    %c0_i32_0 = arith.constant 0 : i32
    %c0_i32_1 = arith.constant 0 : i32
    return %arg0, %c0_i32, %c0_i32_0 : i32, i32, i32
  }
  func.func @transform_1(%arg0: i32) -> (i32, i32) {
    %c0_i32 = arith.constant 0 : i32
    %c0_i32_0 = arith.constant 0 : i32
    %c0_i32_1 = arith.constant 0 : i32
    return %c0_i32, %c0_i32_0 : i32, i32
  }
  func.func @transform_2(%arg0: i32) -> (i32, i32) {
    %c0_i32 = arith.constant 0 : i32
    %c0_i32_0 = arith.constant 0 : i32
    %c0_i32_1 = arith.constant 0 : i32
    return %c0_i32, %c0_i32_0 : i32, i32
  }
  func.func @transform_3(%arg0: i32) -> (i32, i32) {
    %c0_i32 = arith.constant 0 : i32
    %c0_i32_0 = arith.constant 0 : i32
    %c0_i32_1 = arith.constant 0 : i32
    return %c0_i32, %c0_i32_0 : i32, i32
  }
  func.func @transform_4(%arg0: i32) -> (i32, i32) {
    %c0_i32 = arith.constant 0 : i32
    %c0_i32_0 = arith.constant 0 : i32
    %c0_i32_1 = arith.constant 0 : i32
    return %c0_i32, %c0_i32_0 : i32, i32
  }
  func.func @transform_5(%arg0: i32) -> (i32, i32) {
    %c0_i32 = arith.constant 0 : i32
    %c0_i32_0 = arith.constant 0 : i32
    %c0_i32_1 = arith.constant 0 : i32
    return %c0_i32, %c0_i32_0 : i32, i32
  }
  func.func @transform_6(%arg0: i32) -> (i32, i32) {
    %c0_i32 = arith.constant 0 : i32
    %c0_i32_0 = arith.constant 0 : i32
    %c0_i32_1 = arith.constant 0 : i32
    return %c0_i32, %c0_i32_0 : i32, i32
  }
  func.func @transform_7(%arg0: i32) -> (i32, i32) {
    %c0_i32 = arith.constant 0 : i32
    %c0_i32_0 = arith.constant 0 : i32
    %c0_i32_1 = arith.constant 0 : i32
    return %c0_i32, %c0_i32_0 : i32, i32
  }
  func.func @transform_8(%arg0: i32) -> (i32, i32) {
    %c0_i32 = arith.constant 0 : i32
    %c0_i32_0 = arith.constant 0 : i32
    %c0_i32_1 = arith.constant 0 : i32
    return %c0_i32, %c0_i32_0 : i32, i32
  }
  func.func @transform_9(%arg0: i32) -> (i32, i32) {
    %c0_i32 = arith.constant 0 : i32
    %c0_i32_0 = arith.constant 0 : i32
    %c0_i32_1 = arith.constant 0 : i32
    return %c0_i32, %c0_i32_0 : i32, i32
  }
  func.func @transform_10(%arg0: i32) -> (i32, i32) {
    %c0_i32 = arith.constant 0 : i32
    %c0_i32_0 = arith.constant 0 : i32
    %c0_i32_1 = arith.constant 0 : i32
    return %c0_i32, %c0_i32_0 : i32, i32
  }
  func.func @transform_11(%arg0: i32) -> (i32, i32) {
    %c0_i32 = arith.constant 0 : i32
    %c0_i32_0 = arith.constant 0 : i32
    %c0_i32_1 = arith.constant 0 : i32
    return %c0_i32, %c0_i32_0 : i32, i32
  }
  func.func @transform_12(%arg0: i32) -> (i32, i32, i32) {
    %c0_i32 = arith.constant 0 : i32
    %c0_i32_0 = arith.constant 0 : i32
    %c0_i32_1 = arith.constant 0 : i32
    return %arg0, %c0_i32, %c0_i32_0 : i32, i32, i32
  }
}

</mosaic_0001>

<llo_original>
// kernel: _mixer2d_triu_lane.1
$region0: #{_mixer2d_triu_lane.1}
  #allocation0 [shape = 'u32[]', space=smem, size = 0x4, offset = 0x4, fixed_abs, tag = 'smem constant byte address 0x4 - core index']
  #allocation1 [shape = 'u32[144,128]{1,0:T(1,128)}', space=vmem, size = 0x12000, scoped, tag = 'internal scratch']
  %s0 = inlined_call_operand.vmem [shape: f32[1,16,128], index: 0, kind: input, shape index: {}]
  %s1 = inlined_call_operand.vmem [shape: f32[16,128], index: 1, kind: input, shape index: {}]
  %s2 = inlined_call_operand.hbm [shape: f32[16,128], index: 2, kind: input, shape index: {}]
  %s3 = inlined_call_operand.vmem [shape: f32[16,16], index: 3, kind: input, shape index: {}]
  %s4 = inlined_call_operand.hbm [shape: f32[16,128], index: 4, kind: input, shape index: {}]
  %s5 = inlined_call_operand.hbm [shape: f32[16,128], index: 5, kind: input, shape index: {}]
  %s6 = inlined_call_operand.hbm [shape: f32[16,128], index: 6, kind: input, shape index: {}]
  %s7 = inlined_call_operand.vmem [shape: f32[128,128], index: 7, kind: input, shape index: {}]
  %s8 = inlined_call_operand.vmem [shape: f32[128,128], index: 8, kind: input, shape index: {}]
  %s9 = inlined_call_operand.hbm [shape: f32[1,128], index: 9, kind: input, shape index: {}]
  %s10 = inlined_call_operand.vmem [shape: f32[128,128], index: 10, kind: input, shape index: {}]
  %s11 = inlined_call_operand.hbm [shape: f32[1,128], index: 11, kind: input, shape index: {}]
  %s12 = inlined_call_operand.vmem [shape: f32[1,16,128], index: 12, kind: output, shape index: {}]
  %s13 = sld [smem:[#allocation0]]
  $region82: #{_mixer2d_triu_lane.1} parent=0
    _
  %s15 = ssub.s32 1, %s13
  %s16 = scalar_select 0, %s15, %s13
  $region1: #{_mixer2d_triu_lane.1} parent=0
    #allocation2 [shape = 'u8[8192]{0}', space=vmem, size = 0x2000, scoped, tag = 'input window, operand 2, single buffered']
    #allocation3 [shape = 's32[1]{0}', space=sflag, size = 0x4, scoped, tag = 'scoped memory for _mixer2d_triu_lane.1']
    #allocation4 [shape = 'u8[8192]{0}', space=vmem, size = 0x2000, scoped, tag = 'input window, operand 4, single buffered']
    #allocation5 [shape = 's32[1]{0}', space=sflag, size = 0x4, scoped, tag = 'scoped memory for _mixer2d_triu_lane.1']
    #allocation6 [shape = 'u8[8192]{0}', space=vmem, size = 0x2000, scoped, tag = 'input window, operand 5, single buffered']
    #allocation7 [shape = 'u8[8192]{0}', space=vmem, size = 0x2000, scoped, tag = 'input window, operand 6, single buffered']
    #allocation8 [shape = 's32[1]{0}', space=sflag, size = 0x4, scoped, tag = 'scoped memory for _mixer2d_triu_lane.1']
    #allocation9 [shape = 'u8[512]{0}', space=vmem, size = 0x400, scoped, tag = 'input window, operand 9, single buffered']
    #allocation10 [shape = 'u8[512]{0}', space=vmem, size = 0x400, scoped, tag = 'input window, operand 11, single buffered']
    #allocation11 [shape = 's32[1]{0}', space=sflag, size = 0x4, scoped, tag = 'scoped memory for _mixer2d_triu_lane.1']
    %17 = vsyncpa [#allocation3], 0
    %18 = vsyncpa [#allocation5], 0
    %19 = vsyncpa [#allocation8], 0
    %20 = vsyncpa [#allocation11], 0
    // Predicated region
    $region2: #{_mixer2d_triu_lane.1} parent=1 // pred_check
      _
    $region3: #{_mixer2d_triu_lane.1} parent=1 // pred_check_branch
      %22 = sbr.rel (0) target = $region5
    $region4: #{_mixer2d_triu_lane.1} parent=1 // pred_region
      _
    $region5: #{_mixer2d_triu_lane.1} parent=1 // pred_fallthru
      _
    // Predicated region
    $region6: #{_mixer2d_triu_lane.1} parent=1 // pred_check
      _
    $region7: #{_mixer2d_triu_lane.1} parent=1 // pred_check_branch
      %24 = sbr.rel (0) target = $region9
    $region8: #{_mixer2d_triu_lane.1} parent=1 // pred_region
      _
    $region9: #{_mixer2d_triu_lane.1} parent=1 // pred_fallthru
      _
    // Predicated region
    $region10: #{_mixer2d_triu_lane.1} parent=1 // pred_check
      _
    $region11: #{_mixer2d_triu_lane.1} parent=1 // pred_check_branch
      %26 = sbr.rel (0) target = $region13
    $region12: #{_mixer2d_triu_lane.1} parent=1 // pred_region
      %s28 = ssub.s32 256, 256
      %29 = vsyncadd [#allocation3], %s28
      %s30 = sshll.u32 [#allocation2], 4
      %s31 = int_to_ptr.vmem [resolvable:$true] %s30
      %36 = dma.hbm_to_vmem [thread:$0]  %s2, 256, %s31, [#allocation3], 128, 128, 8
    $region13: #{_mixer2d_triu_lane.1} parent=1 // pred_fallthru
      _
    // Predicated region
    $region14: #{_mixer2d_triu_lane.1} parent=1 // pred_check
      _
    $region15: #{_mixer2d_triu_lane.1} parent=1 // pred_check_branch
      %38 = sbr.rel (0) target = $region17
    $region16: #{_mixer2d_triu_lane.1} parent=1 // pred_region
      _
    $region17: #{_mixer2d_triu_lane.1} parent=1 // pred_fallthru
      _
    // Predicated region
    $region18: #{_mixer2d_triu_lane.1} parent=1 // pred_check
      _
    $region19: #{_mixer2d_triu_lane.1} parent=1 // pred_check_branch
      %40 = sbr.rel (0) target = $region21
    $region20: #{_mixer2d_triu_lane.1} parent=1 // pred_region
      %s42 = ssub.s32 256, 256
      %43 = vsyncadd [#allocation5], %s42
      %s44 = sshll.u32 [#allocation4], 4
      %s45 = int_to_ptr.vmem [resolvable:$true] %s44
      %50 = dma.hbm_to_vmem [thread:$0]  %s4, 256, %s45, [#allocation5], 128, 128, 8
    $region21: #{_mixer2d_triu_lane.1} parent=1 // pred_fallthru
      _
    // Predicated region
    $region22: #{_mixer2d_triu_lane.1} parent=1 // pred_check
      _
    $region23: #{_mixer2d_triu_lane.1} parent=1 // pred_check_branch
      %52 = sbr.rel (0) target = $region25
    $region24: #{_mixer2d_triu_lane.1} parent=1 // pred_region
      %s54 = ssub.s32 256, 256
      %55 = vsyncadd [#allocation5], %s54
      %s56 = sshll.u32 [#allocation6], 4
      %s57 = int_to_ptr.vmem [resolvable:$true] %s56
      %62 = dma.hbm_to_vmem [thread:$0]  %s5, 256, %s57, [#allocation5], 128, 128, 8
    $region25: #{_mixer2d_triu_lane.1} parent=1 // pred_fallthru
      _
    // Predicated region
    $region26: #{_mixer2d_triu_lane.1} parent=1 // pred_check
      _
    $region27: #{_mixer2d_triu_lane.1} parent=1 // pred_check_branch
      %64 = sbr.rel (0) target = $region29
    $region28: #{_mixer2d_triu_lane.1} parent=1 // pred_region
      %s66 = ssub.s32 256, 256
      %67 = vsyncadd [#allocation8], %s66
      %s68 = sshll.u32 [#allocation7], 4
      %s69 = int_to_ptr.vmem [resolvable:$true] %s68
      %74 = dma.hbm_to_vmem [thread:$0]  %s6, 256, %s69, [#allocation8], 128, 128, 8
    $region29: #{_mixer2d_triu_lane.1} parent=1 // pred_fallthru
      _
    // Predicated region
    $region30: #{_mixer2d_triu_lane.1} parent=1 // pred_check
      _
    $region31: #{_mixer2d_triu_lane.1} parent=1 // pred_check_branch
      %76 = sbr.rel (0) target = $region33
    $region32: #{_mixer2d_triu_lane.1} parent=1 // pred_region
      _
    $region33: #{_mixer2d_triu_lane.1} parent=1 // pred_fallthru
      _
    // Predicated region
    $region34: #{_mixer2d_triu_lane.1} parent=1 // pred_check
      _
    $region35: #{_mixer2d_triu_lane.1} parent=1 // pred_check_branch
      %78 = sbr.rel (0) target = $region37
    $region36: #{_mixer2d_triu_lane.1} parent=1 // pred_region
      _
    $region37: #{_mixer2d_triu_lane.1} parent=1 // pred_fallthru
      _
    // Predicated region
    $region38: #{_mixer2d_triu_lane.1} parent=1 // pred_check
      _
    $region39: #{_mixer2d_triu_lane.1} parent=1 // pred_check_branch
      %80 = sbr.rel (0) target = $region41
    $region40: #{_mixer2d_triu_lane.1} parent=1 // pred_region
      %s82 = ssub.s32 16, 16
      %83 = vsyncadd [#allocation8], %s82
      %s85 = sshll.u32 [#allocation9], 4
      %s86 = int_to_ptr.vmem [resolvable:$true] %s85
      %88 = dma.hbm_to_vmem [thread:$0]  %s9, 16, %s86, [#allocation8]
    $region41: #{_mixer2d_triu_lane.1} parent=1 // pred_fallthru
      _
    // Predicated region
    $region42: #{_mixer2d_triu_lane.1} parent=1 // pred_check
      _
    $region43: #{_mixer2d_triu_lane.1} parent=1 // pred_check_branch
      %90 = sbr.rel (0) target = $region45
    $region44: #{_mixer2d_triu_lane.1} parent=1 // pred_region
      _
    $region45: #{_mixer2d_triu_lane.1} parent=1 // pred_fallthru
      _
    // Predicated region
    $region46: #{_mixer2d_triu_lane.1} parent=1 // pred_check
      _
    $region47: #{_mixer2d_triu_lane.1} parent=1 // pred_check_branch
      %92 = sbr.rel (0) target = $region49
    $region48: #{_mixer2d_triu_lane.1} parent=1 // pred_region
      %s94 = ssub.s32 16, 16
      %95 = vsyncadd [#allocation11], %s94
      %s97 = sshll.u32 [#allocation10], 4
      %s98 = int_to_ptr.vmem [resolvable:$true] %s97
      %100 = dma.hbm_to_vmem [thread:$0]  %s11, 16, %s98, [#allocation11]
    $region49: #{_mixer2d_triu_lane.1} parent=1 // pred_fallthru
      _
    // Predicated region
    $region50: #{_mixer2d_triu_lane.1} parent=1 // pred_check
      _
    $region51: #{_mixer2d_triu_lane.1} parent=1 // pred_check_branch
      %102 = sbr.rel (0) target = $region53
    $region52: #{_mixer2d_triu_lane.1} parent=1 // pred_region
      %103 = dma.done [#allocation3], 256
    $region53: #{_mixer2d_triu_lane.1} parent=1 // pred_fallthru
      _
    // Predicated region
    $region54: #{_mixer2d_triu_lane.1} parent=1 // pred_check
      _
    $region55: #{_mixer2d_triu_lane.1} parent=1 // pred_check_branch
      %105 = sbr.rel (0) target = $region57
    $region56: #{_mixer2d_triu_lane.1} parent=1 // pred_region
      %106 = dma.done [#allocation5], 256
    $region57: #{_mixer2d_triu_lane.1} parent=1 // pred_fallthru
      _
    // Predicated region
    $region58: #{_mixer2d_triu_lane.1} parent=1 // pred_check
      _
    $region59: #{_mixer2d_triu_lane.1} parent=1 // pred_check_branch
      %108 = sbr.rel (0) target = $region61
    $region60: #{_mixer2d_triu_lane.1} parent=1 // pred_region
      %109 = dma.done [#allocation5], 256
    $region61: #{_mixer2d_triu_lane.1} parent=1 // pred_fallthru
      _
    // Predicated region
    $region62: #{_mixer2d_triu_lane.1} parent=1 // pred_check
      _
    $region63: #{_mixer2d_triu_lane.1} parent=1 // pred_check_branch
      %111 = sbr.rel (0) target = $region65
    $region64: #{_mixer2d_triu_lane.1} parent=1 // pred_region
      %112 = dma.done [#allocation8], 256
    $region65: #{_mixer2d_triu_lane.1} parent=1 // pred_fallthru
      _
    // Predicated region
    $region66: #{_mixer2d_triu_lane.1} parent=1 // pred_check
      _
    $region67: #{_mixer2d_triu_lane.1} parent=1 // pred_check_branch
      %114 = sbr.rel (0) target = $region69
    $region68: #{_mixer2d_triu_lane.1} parent=1 // pred_region
      %115 = dma.done [#allocation8], 16
    $region69: #{_mixer2d_triu_lane.1} parent=1 // pred_fallthru
      _
    // Predicated region
    $region70: #{_mixer2d_triu_lane.1} parent=1 // pred_check
      _
    $region71: #{_mixer2d_triu_lane.1} parent=1 // pred_check_branch
      %117 = sbr.rel (0) target = $region73
    $region72: #{_mixer2d_triu_lane.1} parent=1 // pred_region
      %118 = dma.done [#allocation11], 16
    $region73: #{_mixer2d_triu_lane.1} parent=1 // pred_fallthru
      _
    %v119 = vld [vmem:[%s0] sm:$0xff]
    %v120 = vld [vmem:[%s0 + $0x8] sm:$0xff]
    %v121 = vld [vmem:[%s7] sm:$0xff]
    %v122 = vld [vmem:[%s7 + $0x8] sm:$0xff]
    %v123 = vld [vmem:[%s7 + $0x10] sm:$0xff]
    %v124 = vld [vmem:[%s7 + $0x18] sm:$0xff]
    %v125 = vld [vmem:[%s7 + $0x20] sm:$0xff]
    %v126 = vld [vmem:[%s7 + $0x28] sm:$0xff]
    %v127 = vld [vmem:[%s7 + $0x30] sm:$0xff]
    %v128 = vld [vmem:[%s7 + $0x38] sm:$0xff]
    %v129 = vld [vmem:[%s7 + $0x40] sm:$0xff]
    %v130 = vld [vmem:[%s7 + $0x48] sm:$0xff]
    %v131 = vld [vmem:[%s7 + $0x50] sm:$0xff]
    %v132 = vld [vmem:[%s7 + $0x58] sm:$0xff]
    %v133 = vld [vmem:[%s7 + $0x60] sm:$0xff]
    %v134 = vld [vmem:[%s7 + $0x68] sm:$0xff]
    %v135 = vld [vmem:[%s7 + $0x70] sm:$0xff]
    %v136 = vld [vmem:[%s7 + $0x78] sm:$0xff]
    %v137 = vld [vmem:[%s1] sm:$0xff]
    %v138 = vld [vmem:[%s1 + $0x8] sm:$0xff]
    %v139 = vld [vmem:[#allocation2] sm:$0xff]
    %v140 = vld [vmem:[#allocation2 + $0x8] sm:$0xff]
    %141 = vmatprep.subr.mxu0 0.0
    %142 = vmatpush1.msra.mxu0 %v136
    %143 = vmatprep.subr.mxu0 0.0
    %144 = vmatpush1.msra.mxu0 %v135
    %145 = vmatprep.subr.mxu0 0.0
    %146 = vmatpush1.msra.mxu0 %v134
    %147 = vmatprep.subr.mxu0 0.0
    %148 = vmatpush1.msra.mxu0 %v133
    %149 = vmatprep.subr.mxu0 0.0
    %150 = vmatpush1.msra.mxu0 %v132
    %151 = vmatprep.subr.mxu0 0.0
    %152 = vmatpush1.msra.mxu0 %v131
    %153 = vmatprep.subr.mxu0 0.0
    %154 = vmatpush1.msra.mxu0 %v130
    %155 = vmatprep.subr.mxu0 0.0
    %156 = vmatpush1.msra.mxu0 %v129
    %157 = vmatprep.subr.mxu0 0.0
    %158 = vmatpush1.msra.mxu0 %v128
    %159 = vmatprep.subr.mxu0 0.0
    %160 = vmatpush1.msra.mxu0 %v127
    %161 = vmatprep.subr.mxu0 0.0
    %162 = vmatpush1.msra.mxu0 %v126
    %163 = vmatprep.subr.mxu0 0.0
    %164 = vmatpush1.msra.mxu0 %v125
    %165 = vmatprep.subr.mxu0 0.0
    %166 = vmatpush1.msra.mxu0 %v124
    %167 = vmatprep.subr.mxu0 0.0
    %168 = vmatpush1.msra.mxu0 %v123
    %169 = vmatprep.subr.mxu0 0.0
    %170 = vmatpush1.msra.mxu0 %v122
    %171 = vmatprep.subr.mxu0 0.0
    %172 = vmatpush1.msra.mxu0 %v121
    %173 = vmatprep.subr.mxu0 0.0
    %174 = vmatpush2.msra.mxu0 0.0
    %175 = vmatprep.subr.mxu0 0.0
    %176 = vmatpush2.msra.mxu0 0.0
    %177 = vmatprep.subr.mxu0 0.0
    %178 = vmatpush2.msra.mxu0 0.0
    %179 = vmatprep.subr.mxu0 0.0
    %180 = vmatpush2.msra.mxu0 0.0
    %181 = vmatprep.subr.mxu0 0.0
    %182 = vmatpush2.msra.mxu0 0.0
    %183 = vmatprep.subr.mxu0 0.0
    %184 = vmatpush2.msra.mxu0 0.0
    %185 = vmatprep.subr.mxu0 0.0
    %186 = vmatpush2.msra.mxu0 0.0
    %187 = vmatprep.subr.mxu0 0.0
    %188 = vmatpush2.msra.mxu0 0.0
    %189 = vmatprep.subr.mxu0 0.0
    %190 = vmatpush2.msra.mxu0 0.0
    %191 = vmatprep.subr.mxu0 0.0
    %192 = vmatpush2.msra.mxu0 0.0
    %193 = vmatprep.subr.mxu0 0.0
    %194 = vmatpush2.msra.mxu0 0.0
    %195 = vmatprep.subr.mxu0 0.0
    %196 = vmatpush2.msra.mxu0 0.0
    %197 = vmatprep.subr.mxu0 0.0
    %198 = vmatpush2.msra.mxu0 0.0
    %199 = vmatprep.subr.mxu0 0.0
    %200 = vmatpush2.msra.mxu0 0.0
    %201 = vmatprep.subr.mxu0 0.0
    %202 = vmatpush2.msra.mxu0 0.0
    %203 = vmatprep.subr.mxu0 0.0
    %204 = vmatpush2.msra.mxu0 0.0
    %205 = vmatprep.mubr.f32.mxu0 0.0
    %206 = vmatmul.mubr.f32.gmra.mxu0 %v119
    %v207 = vpop.f32.mrf.mxu0
    %v208 = vadd.f32 0.0, %v207
    %v209 = vpop.f32.mrf.mxu0
    %210 = vmatprep.mubr.f32.mxu0 0.0
    %211 = vmatmul.mubr.f32.gmra.mxu0 %v120
    %v212 = vpop.f32.mrf.mxu0
    %v213 = vadd.f32 0.0, %v212
    %v214 = vpop.f32.mrf.mxu0
    %215 = vdwg.mxu0
    %v216 = vadd.f32 %v208, %v213
    %v217 = vrot.slane %v216, 4
    %v218 = vadd.f32 %v216, %v217
    %v219 = vrot.slane %v218, 2
    %v220 = vadd.f32 %v218, %v219
    %v221 = vrot.slane %v220, 1
    %v222 = vadd.f32 %v220, %v221
    %v223 = vmul.f32 %v222, 0.00390625
    %v224 = vsub.f32 %v119, %v223
    %v225 = vsub.f32 %v120, %v223
    %v226 = vmul.f32 %v224, %v224
    %v227 = vmul.f32 %v225, %v225
    %228 = vmatprep.subr.mxu0 0.0
    %229 = vmatpush1.msra.mxu0 %v136
    %230 = vmatprep.subr.mxu0 0.0
    %231 = vmatpush1.msra.mxu0 %v135
    %232 = vmatprep.subr.mxu0 0.0
    %233 = vmatpush1.msra.mxu0 %v134
    %234 = vmatprep.subr.mxu0 0.0
    %235 = vmatpush1.msra.mxu0 %v133
    %236 = vmatprep.subr.mxu0 0.0
    %237 = vmatpush1.msra.mxu0 %v132
    %238 = vmatprep.subr.mxu0 0.0
    %239 = vmatpush1.msra.mxu0 %v131
    %240 = vmatprep.subr.mxu0 0.0
    %241 = vmatpush1.msra.mxu0 %v130
    %242 = vmatprep.subr.mxu0 0.0
    %243 = vmatpush1.msra.mxu0 %v129
    %244 = vmatprep.subr.mxu0 0.0
    %245 = vmatpush1.msra.mxu0 %v128
    %246 = vmatprep.subr.mxu0 0.0
    %247 = vmatpush1.msra.mxu0 %v127
    %248 = vmatprep.subr.mxu0 0.0
    %249 = vmatpush1.msra.mxu0 %v126
    %250 = vmatprep.subr.mxu0 0.0
    %251 = vmatpush1.msra.mxu0 %v125
    %252 = vmatprep.subr.mxu0 0.0
    %253 = vmatpush1.msra.mxu0 %v124
    %254 = vmatprep.subr.mxu0 0.0
    %255 = vmatpush1.msra.mxu0 %v123
    %256 = vmatprep.subr.mxu0 0.0
    %257 = vmatpush1.msra.mxu0 %v122
    %258 = vmatprep.subr.mxu0 0.0
    %259 = vmatpush1.msra.mxu0 %v121
    %260 = vmatprep.subr.mxu0 0.0
    %261 = vmatpush2.msra.mxu0 0.0
    %262 = vmatprep.subr.mxu0 0.0
    %263 = vmatpush2.msra.mxu0 0.0
    %264 = vmatprep.subr.mxu0 0.0
    %265 = vmatpush2.msra.mxu0 0.0
    %266 = vmatprep.subr.mxu0 0.0
    %267 = vmatpush2.msra.mxu0 0.0
    %268 = vmatprep.subr.mxu0 0.0
    %269 = vmatpush2.msra.mxu0 0.0
    %270 = vmatprep.subr.mxu0 0.0
    %271 = vmatpush2.msra.mxu0 0.0
    %272 = vmatprep.subr.mxu0 0.0
    %273 = vmatpush2.msra.mxu0 0.0
    %274 = vmatprep.subr.mxu0 0.0
    %275 = vmatpush2.msra.mxu0 0.0
    %276 = vmatprep.subr.mxu0 0.0
    %277 = vmatpush2.msra.mxu0 0.0
    %278 = vmatprep.subr.mxu0 0.0
    %279 = vmatpush2.msra.mxu0 0.0
    %280 = vmatprep.subr.mxu0 0.0
    %281 = vmatpush2.msra.mxu0 0.0
    %282 = vmatprep.subr.mxu0 0.0
    %283 = vmatpush2.msra.mxu0 0.0
    %284 = vmatprep.subr.mxu0 0.0
    %285 = vmatpush2.msra.mxu0 0.0
    %286 = vmatprep.subr.mxu0 0.0
    %287 = vmatpush2.msra.mxu0 0.0
    %288 = vmatprep.subr.mxu0 0.0
    %289 = vmatpush2.msra.mxu0 0.0
    %290 = vmatprep.subr.mxu0 0.0
    %291 = vmatpush2.msra.mxu0 0.0
    %292 = vmatprep.mubr.f32.mxu0 0.0
    %293 = vmatmul.mubr.f32.gmra.mxu0 %v226
    %v294 = vpop.f32.mrf.mxu0
    %v295 = vadd.f32 0.0, %v294
    %v296 = vpop.f32.mrf.mxu0
    %297 = vmatprep.mubr.f32.mxu0 0.0
    %298 = vmatmul.mubr.f32.gmra.mxu0 %v227
    %v299 = vpop.f32.mrf.mxu0
    %v300 = vadd.f32 0.0, %v299
    %v301 = vpop.f32.mrf.mxu0
    %302 = vdwg.mxu0
    %v303 = vadd.f32 %v295, %v300
    %v304 = vrot.slane %v303, 4
    %v305 = vadd.f32 %v303, %v304
    %v306 = vrot.slane %v305, 2
    %v307 = vadd.f32 %v305, %v306
    %v308 = vrot.slane %v307, 1
    %v309 = vadd.f32 %v307, %v308
    %v310 = vmul.f32 %v309, 0.00390625
    %v311 = vadd.f32 %v310, 1e-05
    %v312 = vrsqrt.pop %v311
    %v313 = vmul.f32 %v224, %v312
    %v314 = vmul.f32 %v225, %v312
    %v315 = vmul.f32 %v313, %v137
    %v316 = vmul.f32 %v314, %v138
    %v317 = vadd.f32 %v315, %v139
    %v318 = vadd.f32 %v316, %v140
    %v319 = vld [vmem:[%s3] sm:$0xff]
    %v320 = vld [vmem:[%s3 + $0x8] sm:$0xff]
    %v321 = vld [vmem:[#allocation4] sm:$0xff]
    %v322 = vld [vmem:[#allocation4 + $0x8] sm:$0xff]
    %vm323 = vcmask 130048
    %v325 = vsel %vm323, %v319, 0
    %v328 = vsel %vm323, %v320, 0
    %330 = vmatprep.subr.mxu0 0.0
    %331 = vmatpush1.msra.mxu0 0.0
    %332 = vmatprep.subr.mxu0 0.0
    %333 = vmatpush1.msra.mxu0 0.0
    %334 = vmatprep.subr.mxu0 0.0
    %335 = vmatpush1.msra.mxu0 0.0
    %336 = vmatprep.subr.mxu0 0.0
    %337 = vmatpush1.msra.mxu0 0.0
    %338 = vmatprep.subr.mxu0 0.0
    %339 = vmatpush1.msra.mxu0 0.0
    %340 = vmatprep.subr.mxu0 0.0
    %341 = vmatpush1.msra.mxu0 0.0
    %342 = vmatprep.subr.mxu0 0.0
    %343 = vmatpush1.msra.mxu0 0.0
    %344 = vmatprep.subr.mxu0 0.0
    %345 = vmatpush1.msra.mxu0 0.0
    %346 = vmatprep.subr.mxu0 0.0
    %347 = vmatpush1.msra.mxu0 0.0
    %348 = vmatprep.subr.mxu0 0.0
    %349 = vmatpush1.msra.mxu0 0.0
    %350 = vmatprep.subr.mxu0 0.0
    %351 = vmatpush1.msra.mxu0 0.0
    %352 = vmatprep.subr.mxu0 0.0
    %353 = vmatpush1.msra.mxu0 0.0
    %354 = vmatprep.subr.mxu0 0.0
    %355 = vmatpush1.msra.mxu0 0.0
    %356 = vmatprep.subr.mxu0 0.0
    %357 = vmatpush1.msra.mxu0 0.0
    %358 = vmatprep.subr.mxu0 0.0
    %359 = vmatpush1.msra.mxu0 %v318
    %360 = vmatprep.subr.mxu0 0.0
    %361 = vmatpush1.msra.mxu0 %v317
    %362 = vmatprep.subr.mxu0 0.0
    %363 = vmatpush2.msra.mxu0 0.0
    %364 = vmatprep.subr.mxu0 0.0
    %365 = vmatpush2.msra.mxu0 0.0
    %366 = vmatprep.subr.mxu0 0.0
    %367 = vmatpush2.msra.mxu0 0.0
    %368 = vmatprep.subr.mxu0 0.0
    %369 = vmatpush2.msra.mxu0 0.0
    %370 = vmatprep.subr.mxu0 0.0
    %371 = vmatpush2.msra.mxu0 0.0
    %372 = vmatprep.subr.mxu0 0.0
    %373 = vmatpush2.msra.mxu0 0.0
    %374 = vmatprep.subr.mxu0 0.0
    %375 = vmatpush2.msra.mxu0 0.0
    %376 = vmatprep.subr.mxu0 0.0
    %377 = vmatpush2.msra.mxu0 0.0
    %378 = vmatprep.subr.mxu0 0.0
    %379 = vmatpush2.msra.mxu0 0.0
    %380 = vmatprep.subr.mxu0 0.0
    %381 = vmatpush2.msra.mxu0 0.0
    %382 = vmatprep.subr.mxu0 0.0
    %383 = vmatpush2.msra.mxu0 0.0
    %384 = vmatprep.subr.mxu0 0.0
    %385 = vmatpush2.msra.mxu0 0.0
    %386 = vmatprep.subr.mxu0 0.0
    %387 = vmatpush2.msra.mxu0 0.0
    %388 = vmatprep.subr.mxu0 0.0
    %389 = vmatpush2.msra.mxu0 0.0
    %390 = vmatprep.subr.mxu0 0.0
    %391 = vmatpush2.msra.mxu0 0.0
    %392 = vmatprep.subr.mxu0 0.0
    %393 = vmatpush2.msra.mxu0 0.0
    %394 = vmatprep.mubr.f32.mxu0 0.0
    %395 = vmatmul.mubr.f32.gmra.mxu0 %v325
    %v396 = vpop.f32.mrf.mxu0
    %v397 = vadd.f32 %v321, %v396
    %v398 = vpop.f32.mrf.mxu0
    %399 = vmatprep.mubr.f32.mxu0 0.0
    %400 = vmatmul.mubr.f32.gmra.mxu0 %v328
    %v401 = vpop.f32.mrf.mxu0
    %v402 = vadd.f32 %v322, %v401
    %v403 = vpop.f32.mrf.mxu0
    %404 = vdwg.mxu0
    %v405 = vadd.f32 %v397, %v119
    %v406 = vadd.f32 %v402, %v120
    %v407 = vld [vmem:[#allocation6] sm:$0xff]
    %v408 = vld [vmem:[#allocation6 + $0x8] sm:$0xff]
    %v409 = vld [vmem:[#allocation7] sm:$0xff]
    %v410 = vld [vmem:[#allocation7 + $0x8] sm:$0xff]
    %411 = vmatprep.subr.mxu0 0.0
    %412 = vmatpush1.msra.mxu0 %v136
    %413 = vmatprep.subr.mxu0 0.0
    %414 = vmatpush1.msra.mxu0 %v135
    %415 = vmatprep.subr.mxu0 0.0
    %416 = vmatpush1.msra.mxu0 %v134
    %417 = vmatprep.subr.mxu0 0.0
    %418 = vmatpush1.msra.mxu0 %v133
    %419 = vmatprep.subr.mxu0 0.0
    %420 = vmatpush1.msra.mxu0 %v132
    %421 = vmatprep.subr.mxu0 0.0
    %422 = vmatpush1.msra.mxu0 %v131
    %423 = vmatprep.subr.mxu0 0.0
    %424 = vmatpush1.msra.mxu0 %v130
    %425 = vmatprep.subr.mxu0 0.0
    %426 = vmatpush1.msra.mxu0 %v129
    %427 = vmatprep.subr.mxu0 0.0
    %428 = vmatpush1.msra.mxu0 %v128
    %429 = vmatprep.subr.mxu0 0.0
    %430 = vmatpush1.msra.mxu0 %v127
    %431 = vmatprep.subr.mxu0 0.0
    %432 = vmatpush1.msra.mxu0 %v126
    %433 = vmatprep.subr.mxu0 0.0
    %434 = vmatpush1.msra.mxu0 %v125
    %435 = vmatprep.subr.mxu0 0.0
    %436 = vmatpush1.msra.mxu0 %v124
    %437 = vmatprep.subr.mxu0 0.0
    %438 = vmatpush1.msra.mxu0 %v123
    %439 = vmatprep.subr.mxu0 0.0
    %440 = vmatpush1.msra.mxu0 %v122
    %441 = vmatprep.subr.mxu0 0.0
    %442 = vmatpush1.msra.mxu0 %v121
    %443 = vmatprep.subr.mxu0 0.0
    %444 = vmatpush2.msra.mxu0 0.0
    %445 = vmatprep.subr.mxu0 0.0
    %446 = vmatpush2.msra.mxu0 0.0
    %447 = vmatprep.subr.mxu0 0.0
    %448 = vmatpush2.msra.mxu0 0.0
    %449 = vmatprep.subr.mxu0 0.0
    %450 = vmatpush2.msra.mxu0 0.0
    %451 = vmatprep.subr.mxu0 0.0
    %452 = vmatpush2.msra.mxu0 0.0
    %453 = vmatprep.subr.mxu0 0.0
    %454 = vmatpush2.msra.mxu0 0.0
    %455 = vmatprep.subr.mxu0 0.0
    %456 = vmatpush2.msra.mxu0 0.0
    %457 = vmatprep.subr.mxu0 0.0
    %458 = vmatpush2.msra.mxu0 0.0
    %459 = vmatprep.subr.mxu0 0.0
    %460 = vmatpush2.msra.mxu0 0.0
    %461 = vmatprep.subr.mxu0 0.0
    %462 = vmatpush2.msra.mxu0 0.0
    %463 = vmatprep.subr.mxu0 0.0
    %464 = vmatpush2.msra.mxu0 0.0
    %465 = vmatprep.subr.mxu0 0.0
    %466 = vmatpush2.msra.mxu0 0.0
    %467 = vmatprep.subr.mxu0 0.0
    %468 = vmatpush2.msra.mxu0 0.0
    %469 = vmatprep.subr.mxu0 0.0
    %470 = vmatpush2.msra.mxu0 0.0
    %471 = vmatprep.subr.mxu0 0.0
    %472 = vmatpush2.msra.mxu0 0.0
    %473 = vmatprep.subr.mxu0 0.0
    %474 = vmatpush2.msra.mxu0 0.0
    %475 = vmatprep.mubr.f32.mxu0 0.0
    %476 = vmatmul.mubr.f32.gmra.mxu0 %v405
    %v477 = vpop.f32.mrf.mxu0
    %v478 = vadd.f32 0.0, %v477
    %v479 = vpop.f32.mrf.mxu0
    %480 = vmatprep.mubr.f32.mxu0 0.0
    %481 = vmatmul.mubr.f32.gmra.mxu0 %v406
    %v482 = vpop.f32.mrf.mxu0
    %v483 = vadd.f32 0.0, %v482
    %v484 = vpop.f32.mrf.mxu0
    %485 = vdwg.mxu0
    %v486 = vadd.f32 %v478, %v483
    %v487 = vrot.slane %v486, 4
    %v488 = vadd.f32 %v486, %v487
    %v489 = vrot.slane %v488, 2
    %v490 = vadd.f32 %v488, %v489
    %v491 = vrot.slane %v490, 1
    %v492 = vadd.f32 %v490, %v491
    %v493 = vmul.f32 %v492, 0.00390625
    %v494 = vsub.f32 %v405, %v493
    %v495 = vsub.f32 %v406, %v493
    %v496 = vmul.f32 %v494, %v494
    %v497 = vmul.f32 %v495, %v495
    %498 = vmatprep.subr.mxu0 0.0
    %499 = vmatpush1.msra.mxu0 %v136
    %500 = vmatprep.subr.mxu0 0.0
    %501 = vmatpush1.msra.mxu0 %v135
    %502 = vmatprep.subr.mxu0 0.0
    %503 = vmatpush1.msra.mxu0 %v134
    %504 = vmatprep.subr.mxu0 0.0
    %505 = vmatpush1.msra.mxu0 %v133
    %506 = vmatprep.subr.mxu0 0.0
    %507 = vmatpush1.msra.mxu0 %v132
    %508 = vmatprep.subr.mxu0 0.0
    %509 = vmatpush1.msra.mxu0 %v131
    %510 = vmatprep.subr.mxu0 0.0
    %511 = vmatpush1.msra.mxu0 %v130
    %512 = vmatprep.subr.mxu0 0.0
    %513 = vmatpush1.msra.mxu0 %v129
    %514 = vmatprep.subr.mxu0 0.0
    %515 = vmatpush1.msra.mxu0 %v128
    %516 = vmatprep.subr.mxu0 0.0
    %517 = vmatpush1.msra.mxu0 %v127
    %518 = vmatprep.subr.mxu0 0.0
    %519 = vmatpush1.msra.mxu0 %v126
    %520 = vmatprep.subr.mxu0 0.0
    %521 = vmatpush1.msra.mxu0 %v125
    %522 = vmatprep.subr.mxu0 0.0
    %523 = vmatpush1.msra.mxu0 %v124
    %524 = vmatprep.subr.mxu0 0.0
    %525 = vmatpush1.msra.mxu0 %v123
    %526 = vmatprep.subr.mxu0 0.0
    %527 = vmatpush1.msra.mxu0 %v122
    %528 = vmatprep.subr.mxu0 0.0
    %529 = vmatpush1.msra.mxu0 %v121
    %530 = vmatprep.subr.mxu0 0.0
    %531 = vmatpush2.msra.mxu0 0.0
    %532 = vmatprep.subr.mxu0 0.0
    %533 = vmatpush2.msra.mxu0 0.0
    %534 = vmatprep.subr.mxu0 0.0
    %535 = vmatpush2.msra.mxu0 0.0
    %536 = vmatprep.subr.mxu0 0.0
    %537 = vmatpush2.msra.mxu0 0.0
    %538 = vmatprep.subr.mxu0 0.0
    %539 = vmatpush2.msra.mxu0 0.0
    %540 = vmatprep.subr.mxu0 0.0
    %541 = vmatpush2.msra.mxu0 0.0
    %542 = vmatprep.subr.mxu0 0.0
    %543 = vmatpush2.msra.mxu0 0.0
    %544 = vmatprep.subr.mxu0 0.0
    %545 = vmatpush2.msra.mxu0 0.0
    %546 = vmatprep.subr.mxu0 0.0
    %547 = vmatpush2.msra.mxu0 0.0
    %548 = vmatprep.subr.mxu0 0.0
    %549 = vmatpush2.msra.mxu0 0.0
    %550 = vmatprep.subr.mxu0 0.0
    %551 = vmatpush2.msra.mxu0 0.0
    %552 = vmatprep.subr.mxu0 0.0
    %553 = vmatpush2.msra.mxu0 0.0
    %554 = vmatprep.subr.mxu0 0.0
    %555 = vmatpush2.msra.mxu0 0.0
    %556 = vmatprep.subr.mxu0 0.0
    %557 = vmatpush2.msra.mxu0 0.0
    %558 = vmatprep.subr.mxu0 0.0
    %559 = vmatpush2.msra.mxu0 0.0
    %560 = vmatprep.subr.mxu0 0.0
    %561 = vmatpush2.msra.mxu0 0.0
    %562 = vmatprep.mubr.f32.mxu0 0.0
    %563 = vmatmul.mubr.f32.gmra.mxu0 %v496
    %v564 = vpop.f32.mrf.mxu0
    %v565 = vadd.f32 0.0, %v564
    %v566 = vpop.f32.mrf.mxu0
    %567 = vmatprep.mubr.f32.mxu0 0.0
    %568 = vmatmul.mubr.f32.gmra.mxu0 %v497
    %v569 = vpop.f32.mrf.mxu0
    %v570 = vadd.f32 0.0, %v569
    %v571 = vpop.f32.mrf.mxu0
    %572 = vdwg.mxu0
    %v573 = vadd.f32 %v565, %v570
    %v574 = vrot.slane %v573, 4
    %v575 = vadd.f32 %v573, %v574
    %v576 = vrot.slane %v575, 2
    %v577 = vadd.f32 %v575, %v576
    %v578 = vrot.slane %v577, 1
    %v579 = vadd.f32 %v577, %v578
    %v580 = vmul.f32 %v579, 0.00390625
    %v581 = vadd.f32 %v580, 1e-05
    %v582 = vrsqrt.pop %v581
    %v583 = vmul.f32 %v494, %v582
    %v584 = vmul.f32 %v495, %v582
    %v585 = vmul.f32 %v583, %v407
    %v586 = vmul.f32 %v584, %v408
    %v587 = vadd.f32 %v585, %v409
    %v588 = vadd.f32 %v586, %v410
    %v589 = vld [vmem:[%s8] sm:$0xff]
    %v590 = vld [vmem:[%s8 + $0x8] sm:$0xff]
    %v591 = vld [vmem:[%s8 + $0x10] sm:$0xff]
    %v592 = vld [vmem:[%s8 + $0x18] sm:$0xff]
    %v593 = vld [vmem:[%s8 + $0x20] sm:$0xff]
    %v594 = vld [vmem:[%s8 + $0x28] sm:$0xff]
    %v595 = vld [vmem:[%s8 + $0x30] sm:$0xff]
    %v596 = vld [vmem:[%s8 + $0x38] sm:$0xff]
    %v597 = vld [vmem:[%s8 + $0x40] sm:$0xff]
    %v598 = vld [vmem:[%s8 + $0x48] sm:$0xff]
    %v599 = vld [vmem:[%s8 + $0x50] sm:$0xff]
    %v600 = vld [vmem:[%s8 + $0x58] sm:$0xff]
    %v601 = vld [vmem:[%s8 + $0x60] sm:$0xff]
    %v602 = vld [vmem:[%s8 + $0x68] sm:$0xff]
    %v603 = vld [vmem:[%s8 + $0x70] sm:$0xff]
    %v604 = vld [vmem:[%s8 + $0x78] sm:$0xff]
    %v605 = vld [vmem:[#allocation9] sm:$0x1]
    %v607 = vlaneseq
    %v608 = vshrl.u32 %v607, 7
    %v609 = vsub.s32 0, %v608
    %v610 = vrot.slane %v605, %v609
    %612 = vmatprep.subr.mxu0 0.0
    %613 = vmatpush1.msra.mxu0 %v604
    %614 = vmatprep.subr.mxu0 0.0
    %615 = vmatpush1.msra.mxu0 %v603
    %616 = vmatprep.subr.mxu0 0.0
    %617 = vmatpush1.msra.mxu0 %v602
    %618 = vmatprep.subr.mxu0 0.0
    %619 = vmatpush1.msra.mxu0 %v601
    %620 = vmatprep.subr.mxu0 0.0
    %621 = vmatpush1.msra.mxu0 %v600
    %622 = vmatprep.subr.mxu0 0.0
    %623 = vmatpush1.msra.mxu0 %v599
    %624 = vmatprep.subr.mxu0 0.0
    %625 = vmatpush1.msra.mxu0 %v598
    %626 = vmatprep.subr.mxu0 0.0
    %627 = vmatpush1.msra.mxu0 %v597
    %628 = vmatprep.subr.mxu0 0.0
    %629 = vmatpush1.msra.mxu0 %v596
    %630 = vmatprep.subr.mxu0 0.0
    %631 = vmatpush1.msra.mxu0 %v595
    %632 = vmatprep.subr.mxu0 0.0
    %633 = vmatpush1.msra.mxu0 %v594
    %634 = vmatprep.subr.mxu0 0.0
    %635 = vmatpush1.msra.mxu0 %v593
    %636 = vmatprep.subr.mxu0 0.0
    %637 = vmatpush1.msra.mxu0 %v592
    %638 = vmatprep.subr.mxu0 0.0
    %639 = vmatpush1.msra.mxu0 %v591
    %640 = vmatprep.subr.mxu0 0.0
    %641 = vmatpush1.msra.mxu0 %v590
    %642 = vmatprep.subr.mxu0 0.0
    %643 = vmatpush1.msra.mxu0 %v589
    %644 = vmatprep.subr.mxu0 0.0
    %645 = vmatpush2.msra.mxu0 0.0
    %646 = vmatprep.subr.mxu0 0.0
    %647 = vmatpush2.msra.mxu0 0.0
    %648 = vmatprep.subr.mxu0 0.0
    %649 = vmatpush2.msra.mxu0 0.0
    %650 = vmatprep.subr.mxu0 0.0
    %651 = vmatpush2.msra.mxu0 0.0
    %652 = vmatprep.subr.mxu0 0.0
    %653 = vmatpush2.msra.mxu0 0.0
    %654 = vmatprep.subr.mxu0 0.0
    %655 = vmatpush2.msra.mxu0 0.0
    %656 = vmatprep.subr.mxu0 0.0
    %657 = vmatpush2.msra.mxu0 0.0
    %658 = vmatprep.subr.mxu0 0.0
    %659 = vmatpush2.msra.mxu0 0.0
    %660 = vmatprep.subr.mxu0 0.0
    %661 = vmatpush2.msra.mxu0 0.0
    %662 = vmatprep.subr.mxu0 0.0
    %663 = vmatpush2.msra.mxu0 0.0
    %664 = vmatprep.subr.mxu0 0.0
    %665 = vmatpush2.msra.mxu0 0.0
    %666 = vmatprep.subr.mxu0 0.0
    %667 = vmatpush2.msra.mxu0 0.0
    %668 = vmatprep.subr.mxu0 0.0
    %669 = vmatpush2.msra.mxu0 0.0
    %670 = vmatprep.subr.mxu0 0.0
    %671 = vmatpush2.msra.mxu0 0.0
    %672 = vmatprep.subr.mxu0 0.0
    %673 = vmatpush2.msra.mxu0 0.0
    %674 = vmatprep.subr.mxu0 0.0
    %675 = vmatpush2.msra.mxu0 0.0
    %676 = vmatprep.mubr.f32.mxu0 0.0
    %677 = vmatmul.mubr.f32.gmra.mxu0 %v587
    %v678 = vpop.f32.mrf.mxu0
    %v679 = vadd.f32 %v610, %v678
    %v680 = vpop.f32.mrf.mxu0
    %681 = vmatprep.mubr.f32.mxu0 0.0
    %682 = vmatmul.mubr.f32.gmra.mxu0 %v588
    %v683 = vpop.f32.mrf.mxu0
    %v684 = vadd.f32 %v610, %v683
    %v685 = vpop.f32.mrf.mxu0
    %686 = vdwg.mxu0
    %v687 = vmul.f32 %v679, 0.5
    %v688 = vmul.f32 %v684, 0.5
    %v689 = vmul.f32 %v679, 0.70710677
    %v690 = vmul.f32 %v684, 0.70710677
    %v691 = verf.f32.pop %v689
    %v692 = verf.f32.pop %v690
    %v693 = vadd.f32 %v691, 1.0
    %v694 = vadd.f32 %v692, 1.0
    %v695 = vmul.f32 %v687, %v693
    %v696 = vmul.f32 %v688, %v694
    %v697 = vld [vmem:[%s10] sm:$0xff]
    %v698 = vld [vmem:[%s10 + $0x8] sm:$0xff]
    %v699 = vld [vmem:[%s10 + $0x10] sm:$0xff]
    %v700 = vld [vmem:[%s10 + $0x18] sm:$0xff]
    %v701 = vld [vmem:[%s10 + $0x20] sm:$0xff]
    %v702 = vld [vmem:[%s10 + $0x28] sm:$0xff]
    %v703 = vld [vmem:[%s10 + $0x30] sm:$0xff]
    %v704 = vld [vmem:[%s10 + $0x38] sm:$0xff]
    %v705 = vld [vmem:[%s10 + $0x40] sm:$0xff]
    %v706 = vld [vmem:[%s10 + $0x48] sm:$0xff]
    %v707 = vld [vmem:[%s10 + $0x50] sm:$0xff]
    %v708 = vld [vmem:[%s10 + $0x58] sm:$0xff]
    %v709 = vld [vmem:[%s10 + $0x60] sm:$0xff]
    %v710 = vld [vmem:[%s10 + $0x68] sm:$0xff]
    %v711 = vld [vmem:[%s10 + $0x70] sm:$0xff]
    %v712 = vld [vmem:[%s10 + $0x78] sm:$0xff]
    %v713 = vld [vmem:[#allocation10] sm:$0x1]
    %v715 = vlaneseq
    %v716 = vshrl.u32 %v715, 7
    %v717 = vsub.s32 0, %v716
    %v718 = vrot.slane %v713, %v717
    %720 = vmatprep.subr.mxu0 0.0
    %721 = vmatpush1.msra.mxu0 %v712
    %722 = vmatprep.subr.mxu0 0.0
    %723 = vmatpush1.msra.mxu0 %v711
    %724 = vmatprep.subr.mxu0 0.0
    %725 = vmatpush1.msra.mxu0 %v710
    %726 = vmatprep.subr.mxu0 0.0
    %727 = vmatpush1.msra.mxu0 %v709
    %728 = vmatprep.subr.mxu0 0.0
    %729 = vmatpush1.msra.mxu0 %v708
    %730 = vmatprep.subr.mxu0 0.0
    %731 = vmatpush1.msra.mxu0 %v707
    %732 = vmatprep.subr.mxu0 0.0
    %733 = vmatpush1.msra.mxu0 %v706
    %734 = vmatprep.subr.mxu0 0.0
    %735 = vmatpush1.msra.mxu0 %v705
    %736 = vmatprep.subr.mxu0 0.0
    %737 = vmatpush1.msra.mxu0 %v704
    %738 = vmatprep.subr.mxu0 0.0
    %739 = vmatpush1.msra.mxu0 %v703
    %740 = vmatprep.subr.mxu0 0.0
    %741 = vmatpush1.msra.mxu0 %v702
    %742 = vmatprep.subr.mxu0 0.0
    %743 = vmatpush1.msra.mxu0 %v701
    %744 = vmatprep.subr.mxu0 0.0
    %745 = vmatpush1.msra.mxu0 %v700
    %746 = vmatprep.subr.mxu0 0.0
    %747 = vmatpush1.msra.mxu0 %v699
    %748 = vmatprep.subr.mxu0 0.0
    %749 = vmatpush1.msra.mxu0 %v698
    %750 = vmatprep.subr.mxu0 0.0
    %751 = vmatpush1.msra.mxu0 %v697
    %752 = vmatprep.subr.mxu0 0.0
    %753 = vmatpush2.msra.mxu0 0.0
    %754 = vmatprep.subr.mxu0 0.0
    %755 = vmatpush2.msra.mxu0 0.0
    %756 = vmatprep.subr.mxu0 0.0
    %757 = vmatpush2.msra.mxu0 0.0
    %758 = vmatprep.subr.mxu0 0.0
    %759 = vmatpush2.msra.mxu0 0.0
    %760 = vmatprep.subr.mxu0 0.0
    %761 = vmatpush2.msra.mxu0 0.0
    %762 = vmatprep.subr.mxu0 0.0
    %763 = vmatpush2.msra.mxu0 0.0
    %764 = vmatprep.subr.mxu0 0.0
    %765 = vmatpush2.msra.mxu0 0.0
    %766 = vmatprep.subr.mxu0 0.0
    %767 = vmatpush2.msra.mxu0 0.0
    %768 = vmatprep.subr.mxu0 0.0
    %769 = vmatpush2.msra.mxu0 0.0
    %770 = vmatprep.subr.mxu0 0.0
    %771 = vmatpush2.msra.mxu0 0.0
    %772 = vmatprep.subr.mxu0 0.0
    %773 = vmatpush2.msra.mxu0 0.0
    %774 = vmatprep.subr.mxu0 0.0
    %775 = vmatpush2.msra.mxu0 0.0
    %776 = vmatprep.subr.mxu0 0.0
    %777 = vmatpush2.msra.mxu0 0.0
    %778 = vmatprep.subr.mxu0 0.0
    %779 = vmatpush2.msra.mxu0 0.0
    %780 = vmatprep.subr.mxu0 0.0
    %781 = vmatpush2.msra.mxu0 0.0
    %782 = vmatprep.subr.mxu0 0.0
    %783 = vmatpush2.msra.mxu0 0.0
    %784 = vmatprep.mubr.f32.mxu0 0.0
    %785 = vmatmul.mubr.f32.gmra.mxu0 %v695
    %v786 = vpop.f32.mrf.mxu0
    %v787 = vadd.f32 %v718, %v786
    %v788 = vpop.f32.mrf.mxu0
    %789 = vmatprep.mubr.f32.mxu0 0.0
    %790 = vmatmul.mubr.f32.gmra.mxu0 %v696
    %v791 = vpop.f32.mrf.mxu0
    %v792 = vadd.f32 %v718, %v791
    %v793 = vpop.f32.mrf.mxu0
    %794 = vdwg.mxu0
    %v795 = vadd.f32 %v587, %v787
    %v796 = vadd.f32 %v588, %v792
    %797 = vst [vmem:[%s12] sm:$0xff] %v795
    %798 = vst [vmem:[%s12 + $0x8] sm:$0xff] %v796
    // Predicated region
    $region74: #{_mixer2d_triu_lane.1} parent=1 // pred_check
      _
    $region75: #{_mixer2d_triu_lane.1} parent=1 // pred_check_branch
      %800 = sbr.rel (0) target = $region77
    $region76: #{_mixer2d_triu_lane.1} parent=1 // pred_region
      _
    $region77: #{_mixer2d_triu_lane.1} parent=1 // pred_fallthru
      _
    // Predicated region
    $region78: #{_mixer2d_triu_lane.1} parent=1 // pred_check
      _
    $region79: #{_mixer2d_triu_lane.1} parent=1 // pred_check_branch
      %802 = sbr.rel (0) target = $region81
    $region80: #{_mixer2d_triu_lane.1} parent=1 // pred_region
      _
    $region81: #{_mixer2d_triu_lane.1} parent=1 // pred_fallthru
      _
    %803 = vsyncpa [#allocation3], 1
    %804 = vsyncpa [#allocation5], 1
    %805 = vsyncpa [#allocation8], 1
    %806 = vsyncpa [#allocation11], 1

</llo_original>
